<compile_context>
chip_gen: v6e
topology: v6e:2x2x1
jax: 0.10.0
libtpu: 0.0.40
codegen_flags: <defaults>
</compile_context>

<pallas_src>
import functools

import jax
import jax.numpy as jnp
from jax.experimental import pallas as pl
from jax.experimental.pallas import tpu as pltpu


def _round_up(n, m):
    return (n + m - 1) // m * m


@functools.partial(jax.jit, static_argnames=("time_chunk", "batch_block"))
def lstm_classifier_forward(x, params, *, time_chunk=16, batch_block=8):
    """x: (B, n_channels, 1, seq_length) float32; params in PyTorch layout.
    Returns (B, n_classes) softmax probabilities."""
    w_ih, w_hh, b_ih, b_hh, w_fc, b_fc = params
    B, T, _, D = x.shape
    H = w_hh.shape[1]
    C = w_fc.shape[0]
    f32 = jnp.float32

    B_BLK = batch_block                         # sublane-multiple batch block (per core)
    Bp = _round_up(max(B, B_BLK), B_BLK)
    Hp = _round_up(H, 128)                      # lane multiple, per gate
    Cp = _round_up(C, 128)                      # lane-dense output store
    Tc = max(1, min(time_chunk, T))             # time chunk (inner grid axis)
    Tp = _round_up(T, Tc)
    needs_time_mask = Tp != T                   # mask padded trailing timesteps

    # ---- parameters: reorder gates [i,f,g,o] -> [i,f,o,g], pad per gate, transpose ----
    perm = jnp.array([0, 1, 3, 2])
    w_ih_r = w_ih.astype(f32).reshape(4, H, D)[perm]
    w_ih_p = jnp.pad(w_ih_r, ((0, 0), (0, Hp - H), (0, 0)))
    w_ih_p = w_ih_p.transpose(2, 0, 1).reshape(D, 4 * Hp)                # (D, 4Hp)

    w_hh_r = w_hh.astype(f32).reshape(4, H, H)[perm]
    w_hh_p = jnp.pad(w_hh_r, ((0, 0), (0, Hp - H), (0, Hp - H)))
    w_hh_p = w_hh_p.transpose(2, 0, 1).reshape(Hp, 4 * Hp)               # (Hp, 4Hp)

    b_r = (b_ih + b_hh).astype(f32).reshape(4, H)[perm]
    b_p = jnp.pad(b_r, ((0, 0), (0, Hp - H))).reshape(1, 4 * Hp)         # (1, 4Hp)

    w_fc_p = jnp.pad(w_fc.astype(f32).T, ((0, Hp - H), (0, Cp - C)))     # (Hp, Cp)
    b_fc_p = jnp.concatenate(
        [b_fc.astype(f32), jnp.full((Cp - C,), -1e30, f32)])[None, :]    # (1, Cp)

    # ---- input: squeeze(2), time-major so each grid step streams one (Tc,B_BLK,D) chunk ----
    x_sq = x[:, :, 0, :].astype(f32)                                     # (B, T, D)
    x_tm = jnp.transpose(x_sq, (1, 0, 2))                                # (T, B, D)
    x_tm = jnp.pad(x_tm, ((0, Tp - T), (0, Bp - B), (0, 0)))             # (Tp, Bp, D)

    n_b = Bp // B_BLK
    n_t = Tp // Tc

    def kernel(x_ref, w_ih_ref, b_ref, whh_ref, wfc_ref, bfc_ref, out_ref,
               h_sc, c_sc, gx_sc):
        t_blk = pl.program_id(1)

        @pl.when(t_blk == 0)
        def _():
            h_sc[...] = jnp.zeros_like(h_sc)
            c_sc[...] = jnp.zeros_like(c_sc)

        # Per-chunk input projection: no serial dependence on h, one MXU matmul into
        # VMEM scratch (keeps only the small recurrent matmul on the critical path and
        # avoids ever writing the inflated gate tensor to HBM).
        x_chunk = x_ref[...].reshape(Tc * B_BLK, D)
        gx_sc[...] = (jnp.dot(x_chunk, w_ih_ref[...],
                              preferred_element_type=jnp.float32) + b_ref[...])

        whh = whh_ref[...]                                   # resident (Hp, 4Hp)
        t_base = t_blk * Tc

        def step(t_local, carry):
            h, c = carry
            # Only this (B_BLK,Hp)x(Hp,4Hp) matmul is on the serial critical path.
            gates = (gx_sc[pl.ds(t_local * B_BLK, B_BLK), :]
                     + jnp.dot(h, whh, preferred_element_type=jnp.float32))
            sig = jax.nn.sigmoid(gates[:, :3 * Hp])          # fused i | f | o
            g_g = jnp.tanh(gates[:, 3 * Hp:])
            i_g = sig[:, 0 * Hp:1 * Hp]
            f_g = sig[:, 1 * Hp:2 * Hp]
            o_g = sig[:, 2 * Hp:3 * Hp]
            c_new = f_g * c + i_g * g_g
            h_new = o_g * jnp.tanh(c_new)
            if needs_time_mask:                              # static; only when T % Tc != 0
                valid = (t_base + t_local) < T
                h_new = jnp.where(valid, h_new, h)
                c_new = jnp.where(valid, c_new, c)
            return h_new, c_new

        # Bounded unroll: trip count is the (small) time chunk, not the full sequence.
        h, c = jax.lax.fori_loop(0, Tc, step, (h_sc[...], c_sc[...]), unroll=True)
        h_sc[...] = h
        c_sc[...] = c

        @pl.when(t_blk == n_t - 1)
        def _():
            logits = (jnp.dot(h_sc[...], wfc_ref[...],
                              preferred_element_type=jnp.float32) + bfc_ref[...])
            m = jnp.max(logits, axis=1, keepdims=True)
            e = jnp.exp(logits - m)
            # exact reciprocal (approx=True would break the 1e-5 sum-to-1 tolerance)
            out_ref[...] = e * pl.reciprocal(jnp.sum(e, axis=1, keepdims=True))

    # Explicit VMEM budget: bounded independent of T, safe under v7x's 64 MiB/TC.
    vmem_bytes = (
        2 * Tc * B_BLK * D * 4                 # double-buffered x chunk
        + (D + 1) * 4 * Hp * 4                 # w_ih + folded bias
        + Hp * 4 * Hp * 4                      # whh (resident)
        + (Hp + 1) * Cp * 4                    # wfc + bias
        + 2 * B_BLK * Cp * 4                   # output block
        + Tc * B_BLK * 4 * Hp * 4              # per-chunk gate scratch
        + 2 * B_BLK * Hp * 4                   # h / c scratch
    )
    vmem_limit = int(min(max(2 * vmem_bytes, 16 * 1024 * 1024), 48 * 1024 * 1024))

    cost = pl.CostEstimate(
        flops=2 * Tp * Bp * 4 * Hp * (D + Hp) + 2 * Bp * Hp * Cp,
        transcendentals=Tp * Bp * 5 * Hp + Bp * Cp,
        bytes_accessed=4 * (x_tm.size + w_ih_p.size + b_p.size + w_hh_p.size
                            + w_fc_p.size + b_fc_p.size + Bp * Cp),
    )

    out_p = pl.pallas_call(
        kernel,
        out_shape=jax.ShapeDtypeStruct((Bp, Cp), jnp.float32),
        grid=(n_b, n_t),
        in_specs=[
            pl.BlockSpec((Tc, B_BLK, D), lambda b, t: (t, b, 0)),        # x (time-major)
            pl.BlockSpec((D, 4 * Hp), lambda b, t: (0, 0)),              # w_ih^T (padded)
            pl.BlockSpec((1, 4 * Hp), lambda b, t: (0, 0)),              # b_ih + b_hh
            pl.BlockSpec((Hp, 4 * Hp), lambda b, t: (0, 0)),             # w_hh^T (padded)
            pl.BlockSpec((Hp, Cp), lambda b, t: (0, 0)),                 # w_fc^T (padded)
            pl.BlockSpec((1, Cp), lambda b, t: (0, 0)),                  # b_fc (padded)
        ],
        out_specs=pl.BlockSpec((B_BLK, Cp), lambda b, t: (b, 0)),
        scratch_shapes=[
            pltpu.VMEM((B_BLK, Hp), jnp.float32),            # h carry
            pltpu.VMEM((B_BLK, Hp), jnp.float32),            # c carry
            pltpu.VMEM((Tc * B_BLK, 4 * Hp), jnp.float32),   # per-chunk gates
        ],
        compiler_params=pltpu.CompilerParams(
            dimension_semantics=("parallel", "arbitrary"),
            vmem_limit_bytes=vmem_limit),
        cost_estimate=cost,
    )(x_tm, w_ih_p, b_p, w_hh_p, w_fc_p, b_fc_p)

    return out_p[:B, :C]


def init_params(key, seq_length, hidden_dim, n_classes):
    """PyTorch-layout params, U(-1/sqrt(H), 1/sqrt(H)) like nn.LSTM / nn.Linear defaults."""
    ks = jax.random.split(key, 6)
    bound = hidden_dim ** -0.5
    u = lambda k, shape: jax.random.uniform(k, shape, jnp.float32, -bound, bound)
    w_ih = u(ks[0], (4 * hidden_dim, seq_length))   # weight_ih_l0  (4H, D)
    w_hh = u(ks[1], (4 * hidden_dim, hidden_dim))   # weight_hh_l0  (4H, H)
    b_ih = u(ks[2], (4 * hidden_dim,))
    b_hh = u(ks[3], (4 * hidden_dim,))
    w_fc = u(ks[4], (n_classes, hidden_dim))        # Linear weight (C, H)
    b_fc = u(ks[5], (n_classes,))
    return (w_ih, w_hh, b_ih, b_hh, w_fc, b_fc)


def _reference(x, params):
    """Pure-JAX reference of the same forward (PyTorch gate order)."""
    w_ih, w_hh, b_ih, b_hh, w_fc, b_fc = params
    B, T, _, D = x.shape
    H = w_hh.shape[1]
    xs = x[:, :, 0, :].astype(jnp.float32)
    h = jnp.zeros((B, H), jnp.float32)
    c = jnp.zeros((B, H), jnp.float32)
    for t in range(T):
        g = xs[:, t, :] @ w_ih.T + h @ w_hh.T + b_ih + b_hh
        i = jax.nn.sigmoid(g[:, 0 * H:1 * H])
        f = jax.nn.sigmoid(g[:, 1 * H:2 * H])
        gg = jnp.tanh(g[:, 2 * H:3 * H])
        o = jax.nn.sigmoid(g[:, 3 * H:4 * H])
        c = f * c + i * gg
        h = o * jnp.tanh(c)
    logits = h @ w_fc.T + b_fc
    return jax.nn.softmax(logits, axis=1)


if __name__ == "__main__":
    B, n_channels, seq_length = 2, 4, 16     # x: (B, n_channels, 1, seq_length)
    hidden_dim, n_classes = 32, 2

    key = jax.random.PRNGKey(0)
    kx, kp = jax.random.split(key)
    x = jax.random.normal(kx, (B, n_channels, 1, seq_length), jnp.float32)
    params = init_params(kp, seq_length, hidden_dim, n_classes)

    # time_chunk=2 -> two time chunks: exercises the h/c scratch carry across grid steps.
    out = lstm_classifier_forward(x, params, time_chunk=2)
    out = jax.block_until_ready(out)

    ref = _reference(x, params)
    assert out.shape == (B, n_classes)
    assert jnp.allclose(jnp.sum(out, axis=1), 1.0, atol=1e-5)
    assert jnp.allclose(out, ref, atol=1e-5, rtol=1e-5)
    print("KERNEL_OK")
</pallas_src>

<mosaic_0001>
module attributes {stable_mosaic.version = 11 : i64} {
  func.func @kernel(%arg0: i32, %arg1: i32, %arg2: memref<2x8x16xf32, #tpu.memory_space<vmem>>, %arg3: memref<16x512xf32, #tpu.memory_space<vmem>>, %arg4: memref<1x512xf32, #tpu.memory_space<vmem>>, %arg5: memref<128x512xf32, #tpu.memory_space<vmem>>, %arg6: memref<128x128xf32, #tpu.memory_space<vmem>>, %arg7: memref<1x128xf32, #tpu.memory_space<vmem>>, %arg8: memref<8x128xf32, #tpu.memory_space<vmem>>, %arg9: memref<8x128xf32, #tpu.memory_space<vmem>>, %arg10: memref<8x128xf32, #tpu.memory_space<vmem>>, %arg11: memref<16x512xf32, #tpu.memory_space<vmem>>) attributes {dimension_semantics = [#tpu.dimension_semantics<parallel>, #tpu.dimension_semantics<arbitrary>], iteration_bounds = array<i64: 1, 2>, scalar_prefetch = 0 : i64, scratch_operands = 3 : i64, tpu.core_type = #tpu.core_type<tc>, window_params = [{transform_indices = @transform_0, window_bounds = array<i64: 2, 8, 16>}, {pipeline_mode = #tpu.pipeline_mode<synchronous>, transform_indices = @transform_1, window_bounds = array<i64: 16, 512>}, {pipeline_mode = #tpu.pipeline_mode<synchronous>, transform_indices = @transform_2, window_bounds = array<i64: 1, 512>}, {pipeline_mode = #tpu.pipeline_mode<synchronous>, transform_indices = @transform_3, window_bounds = array<i64: 128, 512>}, {pipeline_mode = #tpu.pipeline_mode<synchronous>, transform_indices = @transform_4, window_bounds = array<i64: 128, 128>}, {pipeline_mode = #tpu.pipeline_mode<synchronous>, transform_indices = @transform_5, window_bounds = array<i64: 1, 128>}, {transform_indices = @transform_6, window_bounds = array<i64: 8, 128>}]} {
    %c0_i32 = arith.constant 0 : i32
    %0 = arith.cmpi eq, %arg1, %c0_i32 : i32
    %1 = arith.extui %0 : i1 to i32
    %c0_i32_0 = arith.constant 0 : i32
    %2 = arith.cmpi ne, %1, %c0_i32_0 : i32
    scf.if %2 {
      %cst_29 = arith.constant 0.000000e+00 : f32
      %61 = vector.broadcast %cst_29 : f32 to vector<8x128xf32>
      %c0_30 = arith.constant 0 : index
      %c0_31 = arith.constant 0 : index
      %62 = vector.load %arg9[%c0_30, %c0_31] : memref<8x128xf32, #tpu.memory_space<vmem>>, vector<8x128xf32>
      tpu.vector_store %arg9[%c0_30, %c0_31], %61 {strides = array<i32>} : memref<8x128xf32, #tpu.memory_space<vmem>>, vector<8x128xf32>,
      %cst_32 = arith.constant 0.000000e+00 : f32
      %63 = vector.broadcast %cst_32 : f32 to vector<8x128xf32>
      %c0_33 = arith.constant 0 : index
      %c0_34 = arith.constant 0 : index
      %64 = vector.load %arg10[%c0_33, %c0_34] : memref<8x128xf32, #tpu.memory_space<vmem>>, vector<8x128xf32>
      tpu.vector_store %arg10[%c0_33, %c0_34], %63 {strides = array<i32>} : memref<8x128xf32, #tpu.memory_space<vmem>>, vector<8x128xf32>,
    } else {
    }
    %c0 = arith.constant 0 : index
    %c0_1 = arith.constant 0 : index
    %c0_2 = arith.constant 0 : index
    %3 = vector.load %arg2[%c0, %c0_1, %c0_2] : memref<2x8x16xf32, #tpu.memory_space<vmem>>, vector<2x8x16xf32>
    %4 = vector.shape_cast %3 : vector<2x8x16xf32> to vector<16x16xf32>
    %c0_3 = arith.constant 0 : index
    %c0_4 = arith.constant 0 : index
    %5 = vector.load %arg3[%c0_3, %c0_4] : memref<16x512xf32, #tpu.memory_space<vmem>>, vector<16x512xf32>
    %cst = arith.constant dense<0.000000e+00> : vector<16x512xf32>
    %6 = tpu.matmul %4, %5, %cst {dimension_numbers = #tpu.dot_dimension_numbers<[1], [0], [0], [1], [0, 0, 1, 1], [], []>} : vector<16x16xf32>, vector<16x512xf32>, vector<16x512xf32> -> vector<16x512xf32>
    %c0_5 = arith.constant 0 : index
    %c0_6 = arith.constant 0 : index
    %7 = vector.load %arg4[%c0_5, %c0_6] : memref<1x512xf32, #tpu.memory_space<vmem>>, vector<1x512xf32>
    %8 = vector.broadcast %7 : vector<1x512xf32> to vector<16x512xf32>
    %9 = arith.addf %6, %8 : vector<16x512xf32>
    %c0_7 = arith.constant 0 : index
    %c0_8 = arith.constant 0 : index
    %10 = vector.load %arg11[%c0_7, %c0_8] : memref<16x512xf32, #tpu.memory_space<vmem>>, vector<16x512xf32>
    tpu.vector_store %arg11[%c0_7, %c0_8], %9 {strides = array<i32>} : memref<16x512xf32, #tpu.memory_space<vmem>>, vector<16x512xf32>,
    %c0_9 = arith.constant 0 : index
    %c0_10 = arith.constant 0 : index
    %11 = vector.load %arg5[%c0_9, %c0_10] : memref<128x512xf32, #tpu.memory_space<vmem>>, vector<128x512xf32>
    %c0_11 = arith.constant 0 : index
    %c0_12 = arith.constant 0 : index
    %12 = vector.load %arg9[%c0_11, %c0_12] : memref<8x128xf32, #tpu.memory_space<vmem>>, vector<8x128xf32>
    %c0_13 = arith.constant 0 : index
    %c0_14 = arith.constant 0 : index
    %13 = vector.load %arg10[%c0_13, %c0_14] : memref<8x128xf32, #tpu.memory_space<vmem>>, vector<8x128xf32>
    %c0_i32_15 = arith.constant 0 : i32
    %c8_i32 = arith.constant 8 : i32
    %14 = arith.muli %c0_i32_15, %c8_i32 : i32
    %15 = arith.index_cast %14 : i32 to index
    %c0_16 = arith.constant 0 : index
    %16 = vector.load %arg11[%15, %c0_16] : memref<16x512xf32, #tpu.memory_space<vmem>>, vector<8x512xf32>
    %cst_17 = arith.constant dense<0.000000e+00> : vector<8x512xf32>
    %17 = tpu.matmul %12, %11, %cst_17 {dimension_numbers = #tpu.dot_dimension_numbers<[1], [0], [0], [1], [0, 0, 1, 1], [], []>} : vector<8x128xf32>, vector<128x512xf32>, vector<8x512xf32> -> vector<8x512xf32>
    %18 = arith.addf %16, %17 : vector<8x512xf32>
    %19 = vector.extract_strided_slice %18 {offsets = [0, 0], sizes = [8, 384], strides = [1, 1]} : vector<8x512xf32> to vector<8x384xf32>
    %20 = arith.negf %19 : vector<8x384xf32>
    %21 = math.exp %20 : vector<8x384xf32>
    %cst_18 = arith.constant 1.000000e+00 : f32
    %22 = vector.broadcast %cst_18 : f32 to vector<8x384xf32>
    %23 = arith.addf %22, %21 : vector<8x384xf32>
    %24 = arith.divf %22, %23 : vector<8x384xf32>
    %25 = vector.extract_strided_slice %18 {offsets = [0, 384], sizes = [8, 128], strides = [1, 1]} : vector<8x512xf32> to vector<8x128xf32>
    %26 = math.tanh %25 : vector<8x128xf32>
    %27 = vector.extract_strided_slice %24 {offsets = [0, 0], sizes = [8, 128], strides = [1, 1]} : vector<8x384xf32> to vector<8x128xf32>
    %28 = vector.extract_strided_slice %24 {offsets = [0, 128], sizes = [8, 128], strides = [1, 1]} : vector<8x384xf32> to vector<8x128xf32>
    %29 = vector.extract_strided_slice %24 {offsets = [0, 256], sizes = [8, 128], strides = [1, 1]} : vector<8x384xf32> to vector<8x128xf32>
    %30 = arith.mulf %28, %13 : vector<8x128xf32>
    %31 = arith.mulf %27, %26 : vector<8x128xf32>
    %32 = arith.addf %30, %31 : vector<8x128xf32>
    %33 = math.tanh %32 : vector<8x128xf32>
    %34 = arith.mulf %29, %33 : vector<8x128xf32>
    %c1_i32 = arith.constant 1 : i32
    %c8_i32_19 = arith.constant 8 : i32
    %35 = arith.muli %c1_i32, %c8_i32_19 : i32
    %36 = arith.index_cast %35 : i32 to index
    %c0_20 = arith.constant 0 : index
    %37 = vector.load %arg11[%36, %c0_20] : memref<16x512xf32, #tpu.memory_space<vmem>>, vector<8x512xf32>
    %cst_21 = arith.constant dense<0.000000e+00> : vector<8x512xf32>
    %38 = tpu.matmul %34, %11, %cst_21 {dimension_numbers = #tpu.dot_dimension_numbers<[1], [0], [0], [1], [0, 0, 1, 1], [], []>} : vector<8x128xf32>, vector<128x512xf32>, vector<8x512xf32> -> vector<8x512xf32>
    %39 = arith.addf %37, %38 : vector<8x512xf32>
    %40 = vector.extract_strided_slice %39 {offsets = [0, 0], sizes = [8, 384], strides = [1, 1]} : vector<8x512xf32> to vector<8x384xf32>
    %41 = arith.negf %40 : vector<8x384xf32>
    %42 = math.exp %41 : vector<8x384xf32>
    %cst_22 = arith.constant 1.000000e+00 : f32
    %43 = vector.broadcast %cst_22 : f32 to vector<8x384xf32>
    %44 = arith.addf %43, %42 : vector<8x384xf32>
    %45 = arith.divf %43, %44 : vector<8x384xf32>
    %46 = vector.extract_strided_slice %39 {offsets = [0, 384], sizes = [8, 128], strides = [1, 1]} : vector<8x512xf32> to vector<8x128xf32>
    %47 = math.tanh %46 : vector<8x128xf32>
    %48 = vector.extract_strided_slice %45 {offsets = [0, 0], sizes = [8, 128], strides = [1, 1]} : vector<8x384xf32> to vector<8x128xf32>
    %49 = vector.extract_strided_slice %45 {offsets = [0, 128], sizes = [8, 128], strides = [1, 1]} : vector<8x384xf32> to vector<8x128xf32>
    %50 = vector.extract_strided_slice %45 {offsets = [0, 256], sizes = [8, 128], strides = [1, 1]} : vector<8x384xf32> to vector<8x128xf32>
    %51 = arith.mulf %49, %32 : vector<8x128xf32>
    %52 = arith.mulf %48, %47 : vector<8x128xf32>
    %53 = arith.addf %51, %52 : vector<8x128xf32>
    %54 = math.tanh %53 : vector<8x128xf32>
    %55 = arith.mulf %50, %54 : vector<8x128xf32>
    %c2_i32 = arith.constant 2 : i32
    %c0_23 = arith.constant 0 : index
    %c0_24 = arith.constant 0 : index
    %56 = vector.load %arg9[%c0_23, %c0_24] : memref<8x128xf32, #tpu.memory_space<vmem>>, vector<8x128xf32>
    tpu.vector_store %arg9[%c0_23, %c0_24], %55 {strides = array<i32>} : memref<8x128xf32, #tpu.memory_space<vmem>>, vector<8x128xf32>,
    %c0_25 = arith.constant 0 : index
    %c0_26 = arith.constant 0 : index
    %57 = vector.load %arg10[%c0_25, %c0_26] : memref<8x128xf32, #tpu.memory_space<vmem>>, vector<8x128xf32>
    tpu.vector_store %arg10[%c0_25, %c0_26], %53 {strides = array<i32>} : memref<8x128xf32, #tpu.memory_space<vmem>>, vector<8x128xf32>,
    %c1_i32_27 = arith.constant 1 : i32
    %58 = arith.cmpi eq, %arg1, %c1_i32_27 : i32
    %59 = arith.extui %58 : i1 to i32
    %c0_i32_28 = arith.constant 0 : i32
    %60 = arith.cmpi ne, %59, %c0_i32_28 : i32
    scf.if %60 {
      %c0_29 = arith.constant 0 : index
      %c0_30 = arith.constant 0 : index
      %61 = vector.load %arg9[%c0_29, %c0_30] : memref<8x128xf32, #tpu.memory_space<vmem>>, vector<8x128xf32>
      %c0_31 = arith.constant 0 : index
      %c0_32 = arith.constant 0 : index
      %62 = vector.load %arg6[%c0_31, %c0_32] : memref<128x128xf32, #tpu.memory_space<vmem>>, vector<128x128xf32>
      %cst_33 = arith.constant dense<0.000000e+00> : vector<8x128xf32>
      %63 = tpu.matmul %61, %62, %cst_33 {dimension_numbers = #tpu.dot_dimension_numbers<[1], [0], [0], [1], [0, 0, 1, 1], [], []>} : vector<8x128xf32>, vector<128x128xf32>, vector<8x128xf32> -> vector<8x128xf32>
      %c0_34 = arith.constant 0 : index
      %c0_35 = arith.constant 0 : index
      %64 = vector.load %arg7[%c0_34, %c0_35] : memref<1x128xf32, #tpu.memory_space<vmem>>, vector<1x128xf32>
      %65 = vector.broadcast %64 : vector<1x128xf32> to vector<8x128xf32>
      %66 = arith.addf %63, %65 : vector<8x128xf32>
      %cst_36 = arith.constant dense<0xFF800000> : vector<8xf32>
      %67 = vector.multi_reduction <maximumf>, %66, %cst_36 [1] : vector<8x128xf32> to vector<8xf32>
      %68 = vector.shape_cast %67 : vector<8xf32> to vector<8x1xf32>
      %69 = vector.broadcast %68 : vector<8x1xf32> to vector<8x128xf32>
      %70 = arith.subf %66, %69 : vector<8x128xf32>
      %71 = math.exp %70 : vector<8x128xf32>
      %cst_37 = arith.constant dense<0.000000e+00> : vector<8xf32>
      %72 = vector.multi_reduction <add>, %71, %cst_37 [1] : vector<8x128xf32> to vector<8xf32>
      %73 = vector.shape_cast %72 : vector<8xf32> to vector<8x1xf32>
      %74 = tpu.reciprocal %73 : vector<8x1xf32> -> vector<8x1xf32>
      %75 = vector.broadcast %74 : vector<8x1xf32> to vector<8x128xf32>
      %76 = arith.mulf %71, %75 : vector<8x128xf32>
      %c0_38 = arith.constant 0 : index
      %c0_39 = arith.constant 0 : index
      %77 = vector.load %arg8[%c0_38, %c0_39] : memref<8x128xf32, #tpu.memory_space<vmem>>, vector<8x128xf32>
      tpu.vector_store %arg8[%c0_38, %c0_39], %76 {strides = array<i32>} : memref<8x128xf32, #tpu.memory_space<vmem>>, vector<8x128xf32>,
    } else {
    }
    return
  }
  func.func @transform_0(%arg0: i32, %arg1: i32) -> (i32, i32, i32) {
    %c0_i32 = arith.constant 0 : i32
    %c0_i32_0 = arith.constant 0 : i32
    return %arg1, %arg0, %c0_i32 : i32, i32, i32
  }
  func.func @transform_1(%arg0: i32, %arg1: i32) -> (i32, i32) {
    %c0_i32 = arith.constant 0 : i32
    %c0_i32_0 = arith.constant 0 : i32
    %c0_i32_1 = arith.constant 0 : i32
    return %c0_i32, %c0_i32_0 : i32, i32
  }
  func.func @transform_2(%arg0: i32, %arg1: i32) -> (i32, i32) {
    %c0_i32 = arith.constant 0 : i32
    %c0_i32_0 = arith.constant 0 : i32
    %c0_i32_1 = arith.constant 0 : i32
    return %c0_i32, %c0_i32_0 : i32, i32
  }
  func.func @transform_3(%arg0: i32, %arg1: i32) -> (i32, i32) {
    %c0_i32 = arith.constant 0 : i32
    %c0_i32_0 = arith.constant 0 : i32
    %c0_i32_1 = arith.constant 0 : i32
    return %c0_i32, %c0_i32_0 : i32, i32
  }
  func.func @transform_4(%arg0: i32, %arg1: i32) -> (i32, i32) {
    %c0_i32 = arith.constant 0 : i32
    %c0_i32_0 = arith.constant 0 : i32
    %c0_i32_1 = arith.constant 0 : i32
    return %c0_i32, %c0_i32_0 : i32, i32
  }
  func.func @transform_5(%arg0: i32, %arg1: i32) -> (i32, i32) {
    %c0_i32 = arith.constant 0 : i32
    %c0_i32_0 = arith.constant 0 : i32
    %c0_i32_1 = arith.constant 0 : i32
    return %c0_i32, %c0_i32_0 : i32, i32
  }
  func.func @transform_6(%arg0: i32, %arg1: i32) -> (i32, i32) {
    %c0_i32 = arith.constant 0 : i32
    %c0_i32_0 = arith.constant 0 : i32
    return %arg0, %c0_i32 : i32, i32
  }
}

</mosaic_0001>

<llo_original>
// kernel: lstm_classifier_forward.1
$region0: #{lstm_classifier_forward.1}
  #allocation0 [shape = 'u32[]', space=smem, size = 0x4, offset = 0x4, fixed_abs, tag = 'smem constant byte address 0x4 - core index']
  #allocation1 [shape = 'u32[144,128]{1,0:T(1,128)}', space=vmem, size = 0x12000, scoped, tag = 'internal scratch']
  #allocation2 [shape = 'f32[8,128]{1,0:T(8,128)}', space=vmem, size = 0x1000, scoped, tag = 'scratch operand']
  #allocation3 [shape = 'f32[8,128]{1,0:T(8,128)}', space=vmem, size = 0x1000, scoped, tag = 'scratch operand']
  #allocation4 [shape = 'f32[16,512]{1,0:T(8,128)}', space=vmem, size = 0x8000, scoped, tag = 'scratch operand']
  %s0 = inlined_call_operand.vmem [shape: f32[4,8,16], index: 0, kind: input, shape index: {}]
  %s1 = inlined_call_operand.vmem [shape: f32[16,512], index: 1, kind: input, shape index: {}]
  %s2 = inlined_call_operand.vmem [shape: f32[1,512], index: 2, kind: input, shape index: {}]
  %s3 = inlined_call_operand.vmem [shape: f32[128,512], index: 3, kind: input, shape index: {}]
  %s4 = inlined_call_operand.vmem [shape: f32[128,128], index: 4, kind: input, shape index: {}]
  %s5 = inlined_call_operand.vmem [shape: f32[1,128], index: 5, kind: input, shape index: {}]
  %s6 = inlined_call_operand.vmem [shape: f32[8,128], index: 6, kind: output, shape index: {}]
  %s7 = sld [smem:[#allocation0]]
  $region65: #{lstm_classifier_forward.1} parent=0
    _
  %s9 = ssub.s32 1, %s7
  %s10 = scalar_select 0, %s9, %s7
  loop: start=0, step=1, limit=4
  $region2: #{lstm_classifier_forward.1} parent=0 // loop_pre_header
    _
  $region3: #{lstm_classifier_forward.1} parent=0 // loop_header
    %s12 = sphi 0, %s16
    %p13 = scmp.ge.s32.totalorder %s12, 4
    %s19 = sphi 0, %s31
    %s20 = sphi 0, %s27
    %s21 = sphi 0, %s19
    %s22 = sphi 0, %s20
    %s23 = sphi 0, %s21
    %s24 = sphi 0, %s22
    %s36 = sphi 0, %s38
    %s39 = sphi 0, %s36
    %s40 = sphi 0, %s39
    %s56 = sphi 0, %s40
    %s60 = sphi 0, %s60
    %s62 = sphi 0, %s60
    %s63 = sphi 0, %s62
    %s77 = sphi 0, %s63
    %s81 = sphi 0, %s81
    %s83 = sphi 0, %s81
    %s84 = sphi 0, %s83
    %s98 = sphi 0, %s84
    %s102 = sphi 0, %s102
    %s104 = sphi 0, %s102
    %s105 = sphi 0, %s104
    %s119 = sphi 0, %s105
    %s123 = sphi 0, %s123
    %s125 = sphi 0, %s123
    %s126 = sphi 0, %s125
    %s140 = sphi 0, %s126
    %s144 = sphi 0, %s144
    %s146 = sphi 0, %s144
    %s147 = sphi 0, %s146
    %s161 = sphi 0, %s147
    %s167 = sphi 0, %s169
    %s170 = sphi 0, %s167
    %s171 = sphi 0, %s170
    %s187 = sphi 0, %s171
  $region4: #{lstm_classifier_forward.1} parent=0 // loop_header_branch
    %15 = sbr.rel (%p13) target = $region8
  $region5: #{lstm_classifier_forward.1} parent=0 // loop_body
    %s17 = ssub.s32 %s12, 1
    %s18 = ssub.s32 %s12, 2
    %s25 = sadd.s32 1, %s20
    %p26 = scmp.ge.s32.totalorder %s25, 2
    %s27 = scalar_select %p26, 0, %s25
    %s28 = sadd.s32 1, %s19
    %s29 = scalar_select %p26, %s28, %s19
    %p30 = scmp.ge.s32.totalorder %s29, 1
    %s31 = scalar_select %p30, 0, %s29
    %s32 = ssub.s32 %s20, %s27
    %s33 = ssub.s32 %s19, %s31
    %s34 = sor.u32 %s32, %s33
    %p35 = scmp.eq.s32.totalorder %s34, 0
    %s37 = sadd.s32 %s36, 1
    %s38 = scalar_select %p35, %s36, %s37
    %p41 = pneg %p35
    %p42 = scmp.eq.s32.totalorder %s12, 1
    %p43 = por %p41, %p42
    %p44 = scmp.ne.s32.totalorder %s36, %s39
    %p45 = scmp.eq.s32.totalorder %s12, 0
    %p46 = por %p44, %p45
    %p47 = scmp.ne.s32.totalorder %s36, %s39
    %p48 = scmp.eq.s32.totalorder %s17, 1
    %p49 = por %p47, %p48
    %p50 = scmp.ne.s32.totalorder %s39, %s40
    %p51 = scmp.eq.s32.totalorder %s17, 0
    %p52 = por %p50, %p51
    %p53 = scmp.ne.s32.totalorder %s39, %s40
    %p54 = scmp.eq.s32.totalorder %s18, 1
    %p55 = por %p53, %p54
    %p57 = scmp.ne.s32.totalorder %s40, %s56
    %p58 = scmp.eq.s32.totalorder %s18, 0
    %p59 = por %p57, %p58
    %s61 = sadd.s32 %s60, 1
    %p64 = scmp.eq.s32.totalorder %s12, 1
    %p65 = scmp.ne.s32.totalorder %s60, %s62
    %p66 = scmp.eq.s32.totalorder %s12, 0
    %p67 = por %p65, %p66
    %p68 = scmp.ne.s32.totalorder %s60, %s62
    %p69 = scmp.eq.s32.totalorder %s17, 1
    %p70 = por %p68, %p69
    %p71 = scmp.ne.s32.totalorder %s62, %s63
    %p72 = scmp.eq.s32.totalorder %s17, 0
    %p73 = por %p71, %p72
    %p74 = scmp.ne.s32.totalorder %s62, %s63
    %p75 = scmp.eq.s32.totalorder %s18, 1
    %p76 = por %p74, %p75
    %p78 = scmp.ne.s32.totalorder %s63, %s77
    %p79 = scmp.eq.s32.totalorder %s18, 0
    %p80 = por %p78, %p79
    %s82 = sadd.s32 %s81, 1
    %p85 = scmp.eq.s32.totalorder %s12, 1
    %p86 = scmp.ne.s32.totalorder %s81, %s83
    %p87 = scmp.eq.s32.totalorder %s12, 0
    %p88 = por %p86, %p87
    %p89 = scmp.ne.s32.totalorder %s81, %s83
    %p90 = scmp.eq.s32.totalorder %s17, 1
    %p91 = por %p89, %p90
    %p92 = scmp.ne.s32.totalorder %s83, %s84
    %p93 = scmp.eq.s32.totalorder %s17, 0
    %p94 = por %p92, %p93
    %p95 = scmp.ne.s32.totalorder %s83, %s84
    %p96 = scmp.eq.s32.totalorder %s18, 1
    %p97 = por %p95, %p96
    %p99 = scmp.ne.s32.totalorder %s84, %s98
    %p100 = scmp.eq.s32.totalorder %s18, 0
    %p101 = por %p99, %p100
    %s103 = sadd.s32 %s102, 1
    %p106 = scmp.eq.s32.totalorder %s12, 1
    %p107 = scmp.ne.s32.totalorder %s102, %s104
    %p108 = scmp.eq.s32.totalorder %s12, 0
    %p109 = por %p107, %p108
    %p110 = scmp.ne.s32.totalorder %s102, %s104
    %p111 = scmp.eq.s32.totalorder %s17, 1
    %p112 = por %p110, %p111
    %p113 = scmp.ne.s32.totalorder %s104, %s105
    %p114 = scmp.eq.s32.totalorder %s17, 0
    %p115 = por %p113, %p114
    %p116 = scmp.ne.s32.totalorder %s104, %s105
    %p117 = scmp.eq.s32.totalorder %s18, 1
    %p118 = por %p116, %p117
    %p120 = scmp.ne.s32.totalorder %s105, %s119
    %p121 = scmp.eq.s32.totalorder %s18, 0
    %p122 = por %p120, %p121
    %s124 = sadd.s32 %s123, 1
    %p127 = scmp.eq.s32.totalorder %s12, 1
    %p128 = scmp.ne.s32.totalorder %s123, %s125
    %p129 = scmp.eq.s32.totalorder %s12, 0
    %p130 = por %p128, %p129
    %p131 = scmp.ne.s32.totalorder %s123, %s125
    %p132 = scmp.eq.s32.totalorder %s17, 1
    %p133 = por %p131, %p132
    %p134 = scmp.ne.s32.totalorder %s125, %s126
    %p135 = scmp.eq.s32.totalorder %s17, 0
    %p136 = por %p134, %p135
    %p137 = scmp.ne.s32.totalorder %s125, %s126
    %p138 = scmp.eq.s32.totalorder %s18, 1
    %p139 = por %p137, %p138
    %p141 = scmp.ne.s32.totalorder %s126, %s140
    %p142 = scmp.eq.s32.totalorder %s18, 0
    %p143 = por %p141, %p142
    %s145 = sadd.s32 %s144, 1
    %p148 = scmp.eq.s32.totalorder %s12, 1
    %p149 = scmp.ne.s32.totalorder %s144, %s146
    %p150 = scmp.eq.s32.totalorder %s12, 0
    %p151 = por %p149, %p150
    %p152 = scmp.ne.s32.totalorder %s144, %s146
    %p153 = scmp.eq.s32.totalorder %s17, 1
    %p154 = por %p152, %p153
    %p155 = scmp.ne.s32.totalorder %s146, %s147
    %p156 = scmp.eq.s32.totalorder %s17, 0
    %p157 = por %p155, %p156
    %p158 = scmp.ne.s32.totalorder %s146, %s147
    %p159 = scmp.eq.s32.totalorder %s18, 1
    %p160 = por %p158, %p159
    %p162 = scmp.ne.s32.totalorder %s147, %s161
    %p163 = scmp.eq.s32.totalorder %s18, 0
    %p164 = por %p162, %p163
    %s165 = ssub.s32 %s19, %s31
    %p166 = scmp.eq.s32.totalorder %s165, 0
    %s168 = sadd.s32 %s167, 1
    %s169 = scalar_select %p166, %s167, %s168
    %p172 = pneg %p166
    %p173 = scmp.eq.s32.totalorder %s12, 1
    %p174 = por %p172, %p173
    %p175 = scmp.ne.s32.totalorder %s167, %s170
    %p176 = scmp.eq.s32.totalorder %s12, 0
    %p177 = por %p175, %p176
    %p178 = scmp.ne.s32.totalorder %s167, %s170
    %p179 = scmp.eq.s32.totalorder %s17, 1
    %p180 = por %p178, %p179
    %p181 = scmp.ne.s32.totalorder %s170, %s171
    %p182 = scmp.eq.s32.totalorder %s17, 0
    %p183 = por %p181, %p182
    %p184 = scmp.ne.s32.totalorder %s170, %s171
    %p185 = scmp.eq.s32.totalorder %s18, 1
    %p186 = por %p184, %p185
    %p188 = scmp.ne.s32.totalorder %s171, %s187
    %p189 = scmp.eq.s32.totalorder %s18, 0
    %p190 = por %p188, %p189
    %p191 = scmp.le.s32.totalorder 1, %s12
    %p192 = scmp.lt.s32.totalorder %s12, 3
    %p193 = pnand %p191, %p192
    %p194 = pneg %p193
    // Predicated region
    $region9: #{lstm_classifier_forward.1} parent=5 // pred_check
      _
    $region10: #{lstm_classifier_forward.1} parent=5 // pred_check_branch
      %196 = sbr.rel (%p193) target = $region12
    $region11: #{lstm_classifier_forward.1} parent=5 // pred_region
      %s197 = ssub.s32 %s12, 1
      // Predicated region
      $region13: #{lstm_classifier_forward.1} parent=11 // pred_check
        %p198 = pneg %p73
      $region14: #{lstm_classifier_forward.1} parent=11 // pred_check_branch
        %200 = sbr.rel (%p198) target = $region16
      $region15: #{lstm_classifier_forward.1} parent=11 // pred_region
        _
      $region16: #{lstm_classifier_forward.1} parent=11 // pred_fallthru
        _
      // Predicated region
      $region17: #{lstm_classifier_forward.1} parent=11 // pred_check
        %p201 = pneg %p94
      $region18: #{lstm_classifier_forward.1} parent=11 // pred_check_branch
        %203 = sbr.rel (%p201) target = $region20
      $region19: #{lstm_classifier_forward.1} parent=11 // pred_region
        _
      $region20: #{lstm_classifier_forward.1} parent=11 // pred_fallthru
        _
      // Predicated region
      $region21: #{lstm_classifier_forward.1} parent=11 // pred_check
        %p204 = pneg %p115
      $region22: #{lstm_classifier_forward.1} parent=11 // pred_check_branch
        %206 = sbr.rel (%p204) target = $region24
      $region23: #{lstm_classifier_forward.1} parent=11 // pred_region
        _
      $region24: #{lstm_classifier_forward.1} parent=11 // pred_fallthru
        _
      // Predicated region
      $region25: #{lstm_classifier_forward.1} parent=11 // pred_check
        %p207 = pneg %p136
      $region26: #{lstm_classifier_forward.1} parent=11 // pred_check_branch
        %209 = sbr.rel (%p207) target = $region28
      $region27: #{lstm_classifier_forward.1} parent=11 // pred_region
        _
      $region28: #{lstm_classifier_forward.1} parent=11 // pred_fallthru
        _
      // Predicated region
      $region29: #{lstm_classifier_forward.1} parent=11 // pred_check
        %p210 = pneg %p157
      $region30: #{lstm_classifier_forward.1} parent=11 // pred_check_branch
        %212 = sbr.rel (%p210) target = $region32
      $region31: #{lstm_classifier_forward.1} parent=11 // pred_region
        _
      $region32: #{lstm_classifier_forward.1} parent=11 // pred_fallthru
        _
    $region12: #{lstm_classifier_forward.1} parent=5 // pred_fallthru
      _
    %p213 = scmp.lt.s32.totalorder %s12, 2
    // Predicated region
    $region33: #{lstm_classifier_forward.1} parent=5 // pred_check
      %p214 = pneg %p213
    $region34: #{lstm_classifier_forward.1} parent=5 // pred_check_branch
      %216 = sbr.rel (%p214) target = $region36
    $region35: #{lstm_classifier_forward.1} parent=5 // pred_region
      // Predicated region
      $region37: #{lstm_classifier_forward.1} parent=35 // pred_check
        %p217 = pneg %p46
      $region38: #{lstm_classifier_forward.1} parent=35 // pred_check_branch
        %219 = sbr.rel (%p217) target = $region40
      $region39: #{lstm_classifier_forward.1} parent=35 // pred_region
        %s220 = smul.u32 2, %s20
        %p221 = scmp.lt.s32.totalorder %s220, 3
        %s222 = scalar_select %p221, %s220, 3
        %p223 = scmp.lt.s32.totalorder %s19, 0
        %s224 = scalar_select %p223, %s19, 0
        %s225 = sadd.s32 %s224, %s222
        %s226 = smul.addr %s225, 8
        %s227 = scalar_lea.vmem %s0, %s226
        %s228 = smul.u32 2, %s20
      $region40: #{lstm_classifier_forward.1} parent=35 // pred_fallthru
        _
    $region36: #{lstm_classifier_forward.1} parent=5 // pred_fallthru
      _
    %p229 = scmp.le.s32.totalorder 1, %s12
    %p230 = scmp.lt.s32.totalorder %s12, 3
    %p231 = pnand %p229, %p230
    %p232 = pneg %p231
    // Predicated region
    $region41: #{lstm_classifier_forward.1} parent=5 // pred_check
      _
    $region42: #{lstm_classifier_forward.1} parent=5 // pred_check_branch
      %234 = sbr.rel (%p231) target = $region44
    $region43: #{lstm_classifier_forward.1} parent=5 // pred_region
      %s235 = ssub.s32 %s12, 1
      %s236 = smul.u32 2, %s22
      %p237 = scmp.lt.s32.totalorder %s236, 3
      %s238 = scalar_select %p237, %s236, 3
      %p239 = scmp.lt.s32.totalorder %s21, 0
      %s240 = scalar_select %p239, %s21, 0
      %s241 = sadd.s32 %s240, %s238
      %s242 = smul.addr %s241, 8
      %s243 = scalar_lea.vmem %s0, %s242
      %p244 = pneg %p52
      %p245 = pneg %p49
      %p246 = pneg %p73
      %p247 = pneg %p70
      %p248 = pneg %p94
      %p249 = pneg %p91
      %p250 = pneg %p115
      %p251 = pneg %p112
      %p252 = pneg %p136
      %p253 = pneg %p133
      %p254 = pneg %p157
      %p255 = pneg %p154
      %p256 = pneg %p183
      %p257 = pneg %p180
      %p258 = scmp.lt.s32.totalorder %s21, 0
      %s259 = scalar_select %p258, %s21, 0
      %s260 = smul.addr %s259, 8
      %s261 = scalar_lea.vmem %s6, %s260
      %s262 = smul.u32 2, %s22
      %p263 = scmp.lt.s32.totalorder %s262, 3
      %s264 = scalar_select %p263, %s262, 3
      %p265 = scmp.lt.s32.totalorder %s21, 0
      %s266 = scalar_select %p265, %s21, 0
      %s267 = sadd.s32 %s266, %s264
      %s268 = smul.addr %s267, 8
      %s269 = scalar_lea.vmem %s0, %s268
      %s270 = smul.u32 2, %s22
      %p271 = scmp.lt.s32.totalorder %s21, 0
      %s272 = scalar_select %p271, %s21, 0
      %s273 = smul.addr %s272, 8
      %s274 = scalar_lea.vmem %s6, %s273
      %p275 = scmp.eq.s32.totalorder %s22, 0
      // Predicated region
      $region45: #{lstm_classifier_forward.1} parent=43 // pred_check
        %p276 = pneg %p275
      $region46: #{lstm_classifier_forward.1} parent=43 // pred_check_branch
        %278 = sbr.rel (%p276) target = $region48
      $region47: #{lstm_classifier_forward.1} parent=43 // pred_region
        %279 = vst [vmem:[#allocation2] sm:$0xff] 0.0
        %280 = vst [vmem:[#allocation3] sm:$0xff] 0.0
      $region48: #{lstm_classifier_forward.1} parent=43 // pred_fallthru
        _
      %v281 = vld [vmem:[%s269] sm:$0xff]
      %v282 = vld [vmem:[%s269 + $0x8] sm:$0xff]
      %v283 = vld [vmem:[%s1] sm:$0xff]
      %v284 = vld [vmem:[%s1 + $0x8] sm:$0xff]
      %v285 = vld [vmem:[%s1 + $0x10] sm:$0xff]
      %v286 = vld [vmem:[%s1 + $0x18] sm:$0xff]
      %v287 = vld [vmem:[%s1 + $0x20] sm:$0xff]
      %v288 = vld [vmem:[%s1 + $0x28] sm:$0xff]
      %v289 = vld [vmem:[%s1 + $0x30] sm:$0xff]
      %v290 = vld [vmem:[%s1 + $0x38] sm:$0xff]
      %v291 = vld [vmem:[%s2] sm:$0xf]
      %v293 = vlaneseq
      %v294 = vshrl.u32 %v293, 7
      %v295 = vsub.s32 0, %v294
      %v296 = vrot.slane %v291, %v295
      %v297 = vlaneseq
      %v298 = vshrl.u32 %v297, 7
      %v299 = vsub.s32 1, %v298
      %v300 = vrot.slane %v291, %v299
      %v301 = vlaneseq
      %v302 = vshrl.u32 %v301, 7
      %v303 = vsub.s32 2, %v302
      %v304 = vrot.slane %v291, %v303
      %v305 = vlaneseq
      %v306 = vshrl.u32 %v305, 7
      %v307 = vsub.s32 3, %v306
      %v308 = vrot.slane %v291, %v307
      %vm313 = vcmask 130048
      %v315 = vsel %vm313, %v281, 0
      %v318 = vsel %vm313, %v282, 0
      %320 = vmatprep.subr.mxu0 0.0
      %321 = vmatpush1.msra.mxu0 0.0
      %322 = vmatprep.subr.mxu0 0.0
      %323 = vmatpush1.msra.mxu0 0.0
      %324 = vmatprep.subr.mxu0 0.0
      %325 = vmatpush1.msra.mxu0 0.0
      %326 = vmatprep.subr.mxu0 0.0
      %327 = vmatpush1.msra.mxu0 0.0
      %328 = vmatprep.subr.mxu0 0.0
      %329 = vmatpush1.msra.mxu0 0.0
      %330 = vmatprep.subr.mxu0 0.0
      %331 = vmatpush1.msra.mxu0 0.0
      %332 = vmatprep.subr.mxu0 0.0
      %333 = vmatpush1.msra.mxu0 0.0
      %334 = vmatprep.subr.mxu0 0.0
      %335 = vmatpush1.msra.mxu0 0.0
      %336 = vmatprep.subr.mxu0 0.0
      %337 = vmatpush1.msra.mxu0 0.0
      %338 = vmatprep.subr.mxu0 0.0
      %339 = vmatpush1.msra.mxu0 0.0
      %340 = vmatprep.subr.mxu0 0.0
      %341 = vmatpush1.msra.mxu0 0.0
      %342 = vmatprep.subr.mxu0 0.0
      %343 = vmatpush1.msra.mxu0 0.0
      %344 = vmatprep.subr.mxu0 0.0
      %345 = vmatpush1.msra.mxu0 0.0
      %346 = vmatprep.subr.mxu0 0.0
      %347 = vmatpush1.msra.mxu0 0.0
      %348 = vmatprep.subr.mxu0 %v288
      %349 = vmatpush1.msra.mxu0 %v287
      %350 = vmatprep.subr.mxu0 %v284
      %351 = vmatpush1.msra.mxu0 %v283
      %352 = vmatprep.subr.mxu0 0.0
      %353 = vmatpush2.msra.mxu0 0.0
      %354 = vmatprep.subr.mxu0 0.0
      %355 = vmatpush2.msra.mxu0 0.0
      %356 = vmatprep.subr.mxu0 0.0
      %357 = vmatpush2.msra.mxu0 0.0
      %358 = vmatprep.subr.mxu0 0.0
      %359 = vmatpush2.msra.mxu0 0.0
      %360 = vmatprep.subr.mxu0 0.0
      %361 = vmatpush2.msra.mxu0 0.0
      %362 = vmatprep.subr.mxu0 0.0
      %363 = vmatpush2.msra.mxu0 0.0
      %364 = vmatprep.subr.mxu0 0.0
      %365 = vmatpush2.msra.mxu0 0.0
      %366 = vmatprep.subr.mxu0 0.0
      %367 = vmatpush2.msra.mxu0 0.0
      %368 = vmatprep.subr.mxu0 0.0
      %369 = vmatpush2.msra.mxu0 0.0
      %370 = vmatprep.subr.mxu0 0.0
      %371 = vmatpush2.msra.mxu0 0.0
      %372 = vmatprep.subr.mxu0 0.0
      %373 = vmatpush2.msra.mxu0 0.0
      %374 = vmatprep.subr.mxu0 0.0
      %375 = vmatpush2.msra.mxu0 0.0
      %376 = vmatprep.subr.mxu0 0.0
      %377 = vmatpush2.msra.mxu0 0.0
      %378 = vmatprep.subr.mxu0 0.0
      %379 = vmatpush2.msra.mxu0 0.0
      %380 = vmatprep.subr.mxu0 0.0
      %381 = vmatpush2.msra.mxu0 0.0
      %382 = vmatprep.subr.mxu0 0.0
      %383 = vmatpush2.msra.mxu0 0.0
      %384 = vmatprep.mubr.f32.mxu0 0.0
      %385 = vmatmul.mubr.f32.gmra.mxu0 %v315
      %v386 = vpop.f32.mrf.mxu0
      %v387 = vadd.f32 %v296, %v386
      %v388 = vpop.f32.mrf.mxu0
      %v389 = vadd.f32 %v300, %v388
      %390 = vmatprep.mubr.f32.mxu0 0.0
      %391 = vmatmul.mubr.f32.gmra.mxu0 %v318
      %v392 = vpop.f32.mrf.mxu0
      %v393 = vadd.f32 %v296, %v392
      %v394 = vpop.f32.mrf.mxu0
      %v395 = vadd.f32 %v300, %v394
      %396 = vdwg.mxu0
      %397 = vmatprep.subr.mxu0 0.0
      %398 = vmatpush1.msra.mxu0 0.0
      %399 = vmatprep.subr.mxu0 0.0
      %400 = vmatpush1.msra.mxu0 0.0
      %401 = vmatprep.subr.mxu0 0.0
      %402 = vmatpush1.msra.mxu0 0.0
      %403 = vmatprep.subr.mxu0 0.0
      %404 = vmatpush1.msra.mxu0 0.0
      %405 = vmatprep.subr.mxu0 0.0
      %406 = vmatpush1.msra.mxu0 0.0
      %407 = vmatprep.subr.mxu0 0.0
      %408 = vmatpush1.msra.mxu0 0.0
      %409 = vmatprep.subr.mxu0 0.0
      %410 = vmatpush1.msra.mxu0 0.0
      %411 = vmatprep.subr.mxu0 0.0
      %412 = vmatpush1.msra.mxu0 0.0
      %413 = vmatprep.subr.mxu0 0.0
      %414 = vmatpush1.msra.mxu0 0.0
      %415 = vmatprep.subr.mxu0 0.0
      %416 = vmatpush1.msra.mxu0 0.0
      %417 = vmatprep.subr.mxu0 0.0
      %418 = vmatpush1.msra.mxu0 0.0
      %419 = vmatprep.subr.mxu0 0.0
      %420 = vmatpush1.msra.mxu0 0.0
      %421 = vmatprep.subr.mxu0 0.0
      %422 = vmatpush1.msra.mxu0 0.0
      %423 = vmatprep.subr.mxu0 0.0
      %424 = vmatpush1.msra.mxu0 0.0
      %425 = vmatprep.subr.mxu0 %v290
      %426 = vmatpush1.msra.mxu0 %v289
      %427 = vmatprep.subr.mxu0 %v286
      %428 = vmatpush1.msra.mxu0 %v285
      %429 = vmatprep.subr.mxu0 0.0
      %430 = vmatpush2.msra.mxu0 0.0
      %431 = vmatprep.subr.mxu0 0.0
      %432 = vmatpush2.msra.mxu0 0.0
      %433 = vmatprep.subr.mxu0 0.0
      %434 = vmatpush2.msra.mxu0 0.0
      %435 = vmatprep.subr.mxu0 0.0
      %436 = vmatpush2.msra.mxu0 0.0
      %437 = vmatprep.subr.mxu0 0.0
      %438 = vmatpush2.msra.mxu0 0.0
      %439 = vmatprep.subr.mxu0 0.0
      %440 = vmatpush2.msra.mxu0 0.0
      %441 = vmatprep.subr.mxu0 0.0
      %442 = vmatpush2.msra.mxu0 0.0
      %443 = vmatprep.subr.mxu0 0.0
      %444 = vmatpush2.msra.mxu0 0.0
      %445 = vmatprep.subr.mxu0 0.0
      %446 = vmatpush2.msra.mxu0 0.0
      %447 = vmatprep.subr.mxu0 0.0
      %448 = vmatpush2.msra.mxu0 0.0
      %449 = vmatprep.subr.mxu0 0.0
      %450 = vmatpush2.msra.mxu0 0.0
      %451 = vmatprep.subr.mxu0 0.0
      %452 = vmatpush2.msra.mxu0 0.0
      %453 = vmatprep.subr.mxu0 0.0
      %454 = vmatpush2.msra.mxu0 0.0
      %455 = vmatprep.subr.mxu0 0.0
      %456 = vmatpush2.msra.mxu0 0.0
      %457 = vmatprep.subr.mxu0 0.0
      %458 = vmatpush2.msra.mxu0 0.0
      %459 = vmatprep.subr.mxu0 0.0
      %460 = vmatpush2.msra.mxu0 0.0
      %461 = vmatprep.mubr.f32.mxu0 0.0
      %462 = vmatmul.mubr.f32.gmra.mxu0 %v315
      %v463 = vpop.f32.mrf.mxu0
      %v464 = vadd.f32 %v304, %v463
      %v465 = vpop.f32.mrf.mxu0
      %v466 = vadd.f32 %v308, %v465
      %467 = vmatprep.mubr.f32.mxu0 0.0
      %468 = vmatmul.mubr.f32.gmra.mxu0 %v318
      %v469 = vpop.f32.mrf.mxu0
      %v470 = vadd.f32 %v304, %v469
      %v471 = vpop.f32.mrf.mxu0
      %v472 = vadd.f32 %v308, %v471
      %473 = vdwg.mxu0
      %474 = vst [vmem:[#allocation4] sm:$0xff] %v387
      %475 = vst [vmem:[#allocation4 + $0x8] sm:$0xff] %v389
      %476 = vst [vmem:[#allocation4 + $0x10] sm:$0xff] %v464
      %477 = vst [vmem:[#allocation4 + $0x18] sm:$0xff] %v466
      %478 = vst [vmem:[#allocation4 + $0x20] sm:$0xff] %v393
      %479 = vst [vmem:[#allocation4 + $0x28] sm:$0xff] %v395
      %480 = vst [vmem:[#allocation4 + $0x30] sm:$0xff] %v470
      %481 = vst [vmem:[#allocation4 + $0x38] sm:$0xff] %v472
      %v482 = vld [vmem:[%s3] sm:$0xff]
      %v483 = vld [vmem:[%s3 + $0x8] sm:$0xff]
      %v484 = vld [vmem:[%s3 + $0x10] sm:$0xff]
      %v485 = vld [vmem:[%s3 + $0x18] sm:$0xff]
      %v486 = vld [vmem:[%s3 + $0x20] sm:$0xff]
      %v487 = vld [vmem:[%s3 + $0x28] sm:$0xff]
      %v488 = vld [vmem:[%s3 + $0x30] sm:$0xff]
      %v489 = vld [vmem:[%s3 + $0x38] sm:$0xff]
      %v490 = vld [vmem:[%s3 + $0x40] sm:$0xff]
      %v491 = vld [vmem:[%s3 + $0x48] sm:$0xff]
      %v492 = vld [vmem:[%s3 + $0x50] sm:$0xff]
      %v493 = vld [vmem:[%s3 + $0x58] sm:$0xff]
      %v494 = vld [vmem:[%s3 + $0x60] sm:$0xff]
      %v495 = vld [vmem:[%s3 + $0x68] sm:$0xff]
      %v496 = vld [vmem:[%s3 + $0x70] sm:$0xff]
      %v497 = vld [vmem:[%s3 + $0x78] sm:$0xff]
      %v498 = vld [vmem:[%s3 + $0x80] sm:$0xff]
      %v499 = vld [vmem:[%s3 + $0x88] sm:$0xff]
      %v500 = vld [vmem:[%s3 + $0x90] sm:$0xff]
      %v501 = vld [vmem:[%s3 + $0x98] sm:$0xff]
      %v502 = vld [vmem:[%s3 + $0xa0] sm:$0xff]
      %v503 = vld [vmem:[%s3 + $0xa8] sm:$0xff]
      %v504 = vld [vmem:[%s3 + $0xb0] sm:$0xff]
      %v505 = vld [vmem:[%s3 + $0xb8] sm:$0xff]
      %v506 = vld [vmem:[%s3 + $0xc0] sm:$0xff]
      %v507 = vld [vmem:[%s3 + $0xc8] sm:$0xff]
      %v508 = vld [vmem:[%s3 + $0xd0] sm:$0xff]
      %v509 = vld [vmem:[%s3 + $0xd8] sm:$0xff]
      %v510 = vld [vmem:[%s3 + $0xe0] sm:$0xff]
      %v511 = vld [vmem:[%s3 + $0xe8] sm:$0xff]
      %v512 = vld [vmem:[%s3 + $0xf0] sm:$0xff]
      %v513 = vld [vmem:[%s3 + $0xf8] sm:$0xff]
      %v514 = vld [vmem:[%s3 + $0x100] sm:$0xff]
      %v515 = vld [vmem:[%s3 + $0x108] sm:$0xff]
      %v516 = vld [vmem:[%s3 + $0x110] sm:$0xff]
      %v517 = vld [vmem:[%s3 + $0x118] sm:$0xff]
      %v518 = vld [vmem:[%s3 + $0x120] sm:$0xff]
      %v519 = vld [vmem:[%s3 + $0x128] sm:$0xff]
      %v520 = vld [vmem:[%s3 + $0x130] sm:$0xff]
      %v521 = vld [vmem:[%s3 + $0x138] sm:$0xff]
      %v522 = vld [vmem:[%s3 + $0x140] sm:$0xff]
      %v523 = vld [vmem:[%s3 + $0x148] sm:$0xff]
      %v524 = vld [vmem:[%s3 + $0x150] sm:$0xff]
      %v525 = vld [vmem:[%s3 + $0x158] sm:$0xff]
      %v526 = vld [vmem:[%s3 + $0x160] sm:$0xff]
      %v527 = vld [vmem:[%s3 + $0x168] sm:$0xff]
      %v528 = vld [vmem:[%s3 + $0x170] sm:$0xff]
      %v529 = vld [vmem:[%s3 + $0x178] sm:$0xff]
      %v530 = vld [vmem:[%s3 + $0x180] sm:$0xff]
      %v531 = vld [vmem:[%s3 + $0x188] sm:$0xff]
      %v532 = vld [vmem:[%s3 + $0x190] sm:$0xff]
      %v533 = vld [vmem:[%s3 + $0x198] sm:$0xff]
      %v534 = vld [vmem:[%s3 + $0x1a0] sm:$0xff]
      %v535 = vld [vmem:[%s3 + $0x1a8] sm:$0xff]
      %v536 = vld [vmem:[%s3 + $0x1b0] sm:$0xff]
      %v537 = vld [vmem:[%s3 + $0x1b8] sm:$0xff]
      %v538 = vld [vmem:[%s3 + $0x1c0] sm:$0xff]
      %v539 = vld [vmem:[%s3 + $0x1c8] sm:$0xff]
      %v540 = vld [vmem:[%s3 + $0x1d0] sm:$0xff]
      %v541 = vld [vmem:[%s3 + $0x1d8] sm:$0xff]
      %v542 = vld [vmem:[%s3 + $0x1e0] sm:$0xff]
      %v543 = vld [vmem:[%s3 + $0x1e8] sm:$0xff]
      %v544 = vld [vmem:[%s3 + $0x1f0] sm:$0xff]
      %v545 = vld [vmem:[%s3 + $0x1f8] sm:$0xff]
      %v546 = vld [vmem:[#allocation2] sm:$0xff]
      %v547 = vld [vmem:[#allocation3] sm:$0xff]
      %v548 = vld [vmem:[#allocation4] sm:$0xff]
      %v549 = vld [vmem:[#allocation4 + $0x8] sm:$0xff]
      %v550 = vld [vmem:[#allocation4 + $0x10] sm:$0xff]
      %v551 = vld [vmem:[#allocation4 + $0x18] sm:$0xff]
      %552 = vmatprep.subr.mxu0 %v543
      %553 = vmatpush1.msra.mxu0 %v542
      %554 = vmatprep.subr.mxu0 %v539
      %555 = vmatpush1.msra.mxu0 %v538
      %556 = vmatprep.subr.mxu0 %v535
      %557 = vmatpush1.msra.mxu0 %v534
      %558 = vmatprep.subr.mxu0 %v531
      %559 = vmatpush1.msra.mxu0 %v530
      %560 = vmatprep.subr.mxu0 %v527
      %561 = vmatpush1.msra.mxu0 %v526
      %562 = vmatprep.subr.mxu0 %v523
      %563 = vmatpush1.msra.mxu0 %v522
      %564 = vmatprep.subr.mxu0 %v519
      %565 = vmatpush1.msra.mxu0 %v518
      %566 = vmatprep.subr.mxu0 %v515
      %567 = vmatpush1.msra.mxu0 %v514
      %568 = vmatprep.subr.mxu0 %v511
      %569 = vmatpush1.msra.mxu0 %v510
      %570 = vmatprep.subr.mxu0 %v507
      %571 = vmatpush1.msra.mxu0 %v506
      %572 = vmatprep.subr.mxu0 %v503
      %573 = vmatpush1.msra.mxu0 %v502
      %574 = vmatprep.subr.mxu0 %v499
      %575 = vmatpush1.msra.mxu0 %v498
      %576 = vmatprep.subr.mxu0 %v495
      %577 = vmatpush1.msra.mxu0 %v494
      %578 = vmatprep.subr.mxu0 %v491
      %579 = vmatpush1.msra.mxu0 %v490
      %580 = vmatprep.subr.mxu0 %v487
      %581 = vmatpush1.msra.mxu0 %v486
      %582 = vmatprep.subr.mxu0 %v483
      %583 = vmatpush1.msra.mxu0 %v482
      %584 = vmatprep.subr.mxu0 0.0
      %585 = vmatpush2.msra.mxu0 0.0
      %586 = vmatprep.subr.mxu0 0.0
      %587 = vmatpush2.msra.mxu0 0.0
      %588 = vmatprep.subr.mxu0 0.0
      %589 = vmatpush2.msra.mxu0 0.0
      %590 = vmatprep.subr.mxu0 0.0
      %591 = vmatpush2.msra.mxu0 0.0
      %592 = vmatprep.subr.mxu0 0.0
      %593 = vmatpush2.msra.mxu0 0.0
      %594 = vmatprep.subr.mxu0 0.0
      %595 = vmatpush2.msra.mxu0 0.0
      %596 = vmatprep.subr.mxu0 0.0
      %597 = vmatpush2.msra.mxu0 0.0
      %598 = vmatprep.subr.mxu0 0.0
      %599 = vmatpush2.msra.mxu0 0.0
      %600 = vmatprep.subr.mxu0 0.0
      %601 = vmatpush2.msra.mxu0 0.0
      %602 = vmatprep.subr.mxu0 0.0
      %603 = vmatpush2.msra.mxu0 0.0
      %604 = vmatprep.subr.mxu0 0.0
      %605 = vmatpush2.msra.mxu0 0.0
      %606 = vmatprep.subr.mxu0 0.0
      %607 = vmatpush2.msra.mxu0 0.0
      %608 = vmatprep.subr.mxu0 0.0
      %609 = vmatpush2.msra.mxu0 0.0
      %610 = vmatprep.subr.mxu0 0.0
      %611 = vmatpush2.msra.mxu0 0.0
      %612 = vmatprep.subr.mxu0 0.0
      %613 = vmatpush2.msra.mxu0 0.0
      %614 = vmatprep.subr.mxu0 0.0
      %615 = vmatpush2.msra.mxu0 0.0
      %616 = vmatprep.mubr.f32.mxu0 0.0
      %617 = vmatmul.mubr.f32.gmra.mxu0 %v546
      %v618 = vpop.f32.mrf.mxu0
      %v619 = vadd.f32 0.0, %v618
      %v620 = vpop.f32.mrf.mxu0
      %v621 = vadd.f32 0.0, %v620
      %622 = vdwg.mxu0
      %623 = vmatprep.subr.mxu0 %v545
      %624 = vmatpush1.msra.mxu0 %v544
      %625 = vmatprep.subr.mxu0 %v541
      %626 = vmatpush1.msra.mxu0 %v540
      %627 = vmatprep.subr.mxu0 %v537
      %628 = vmatpush1.msra.mxu0 %v536
      %629 = vmatprep.subr.mxu0 %v533
      %630 = vmatpush1.msra.mxu0 %v532
      %631 = vmatprep.subr.mxu0 %v529
      %632 = vmatpush1.msra.mxu0 %v528
      %633 = vmatprep.subr.mxu0 %v525
      %634 = vmatpush1.msra.mxu0 %v524
      %635 = vmatprep.subr.mxu0 %v521
      %636 = vmatpush1.msra.mxu0 %v520
      %637 = vmatprep.subr.mxu0 %v517
      %638 = vmatpush1.msra.mxu0 %v516
      %639 = vmatprep.subr.mxu0 %v513
      %640 = vmatpush1.msra.mxu0 %v512
      %641 = vmatprep.subr.mxu0 %v509
      %642 = vmatpush1.msra.mxu0 %v508
      %643 = vmatprep.subr.mxu0 %v505
      %644 = vmatpush1.msra.mxu0 %v504
      %645 = vmatprep.subr.mxu0 %v501
      %646 = vmatpush1.msra.mxu0 %v500
      %647 = vmatprep.subr.mxu0 %v497
      %648 = vmatpush1.msra.mxu0 %v496
      %649 = vmatprep.subr.mxu0 %v493
      %650 = vmatpush1.msra.mxu0 %v492
      %651 = vmatprep.subr.mxu0 %v489
      %652 = vmatpush1.msra.mxu0 %v488
      %653 = vmatprep.subr.mxu0 %v485
      %654 = vmatpush1.msra.mxu0 %v484
      %655 = vmatprep.subr.mxu0 0.0
      %656 = vmatpush2.msra.mxu0 0.0
      %657 = vmatprep.subr.mxu0 0.0
      %658 = vmatpush2.msra.mxu0 0.0
      %659 = vmatprep.subr.mxu0 0.0
      %660 = vmatpush2.msra.mxu0 0.0
      %661 = vmatprep.subr.mxu0 0.0
      %662 = vmatpush2.msra.mxu0 0.0
      %663 = vmatprep.subr.mxu0 0.0
      %664 = vmatpush2.msra.mxu0 0.0
      %665 = vmatprep.subr.mxu0 0.0
      %666 = vmatpush2.msra.mxu0 0.0
      %667 = vmatprep.subr.mxu0 0.0
      %668 = vmatpush2.msra.mxu0 0.0
      %669 = vmatprep.subr.mxu0 0.0
      %670 = vmatpush2.msra.mxu0 0.0
      %671 = vmatprep.subr.mxu0 0.0
      %672 = vmatpush2.msra.mxu0 0.0
      %673 = vmatprep.subr.mxu0 0.0
      %674 = vmatpush2.msra.mxu0 0.0
      %675 = vmatprep.subr.mxu0 0.0
      %676 = vmatpush2.msra.mxu0 0.0
      %677 = vmatprep.subr.mxu0 0.0
      %678 = vmatpush2.msra.mxu0 0.0
      %679 = vmatprep.subr.mxu0 0.0
      %680 = vmatpush2.msra.mxu0 0.0
      %681 = vmatprep.subr.mxu0 0.0
      %682 = vmatpush2.msra.mxu0 0.0
      %683 = vmatprep.subr.mxu0 0.0
      %684 = vmatpush2.msra.mxu0 0.0
      %685 = vmatprep.subr.mxu0 0.0
      %686 = vmatpush2.msra.mxu0 0.0
      %687 = vmatprep.mubr.f32.mxu0 0.0
      %688 = vmatmul.mubr.f32.gmra.mxu0 %v546
      %v689 = vpop.f32.mrf.mxu0
      %v690 = vadd.f32 0.0, %v689
      %v691 = vpop.f32.mrf.mxu0
      %v692 = vadd.f32 0.0, %v691
      %693 = vdwg.mxu0
      %v694 = vadd.f32 %v548, %v619
      %v695 = vadd.f32 %v549, %v621
      %v696 = vadd.f32 %v550, %v690
      %v697 = vadd.f32 %v551, %v692
      %v698 = vxor.u32 %v694, 2147483648
      %v699 = vxor.u32 %v695, 2147483648
      %v700 = vxor.u32 %v696, 2147483648
      %v701 = vmul.f32 %v698, 1.442695
      %v702 = vpow.pop %v701
      %v703 = vmul.f32 %v699, 1.442695
      %v704 = vpow.pop %v703
      %v705 = vmul.f32 %v700, 1.442695
      %v706 = vpow.pop %v705
      %v707 = vadd.f32 %v702, 1.0
      %v708 = vadd.f32 %v704, 1.0
      %v709 = vadd.f32 %v706, 1.0
      %v710 = vrcp.pop %v707
      %v711 = vmul.f32 1.0, %v710
      %v712 = vrcp.pop %v708
      %v713 = vmul.f32 1.0, %v712
      %v714 = vrcp.pop %v709
      %v715 = vmul.f32 1.0, %v714
      %v716 = vtanh.pop %v697
      %v717 = vmul.f32 %v713, %v547
      %v718 = vmul.f32 %v711, %v716
      %v719 = vadd.f32 %v717, %v718
      %v720 = vtanh.pop %v719
      %v721 = vmul.f32 %v715, %v720
      %v722 = vld [vmem:[#allocation4 + $0x20] sm:$0xff]
      %v723 = vld [vmem:[#allocation4 + $0x28] sm:$0xff]
      %v724 = vld [vmem:[#allocation4 + $0x30] sm:$0xff]
      %v725 = vld [vmem:[#allocation4 + $0x38] sm:$0xff]
      %726 = vmatprep.subr.mxu0 %v543
      %727 = vmatpush1.msra.mxu0 %v542
      %728 = vmatprep.subr.mxu0 %v539
      %729 = vmatpush1.msra.mxu0 %v538
      %730 = vmatprep.subr.mxu0 %v535
      %731 = vmatpush1.msra.mxu0 %v534
      %732 = vmatprep.subr.mxu0 %v531
      %733 = vmatpush1.msra.mxu0 %v530
      %734 = vmatprep.subr.mxu0 %v527
      %735 = vmatpush1.msra.mxu0 %v526
      %736 = vmatprep.subr.mxu0 %v523
      %737 = vmatpush1.msra.mxu0 %v522
      %738 = vmatprep.subr.mxu0 %v519
      %739 = vmatpush1.msra.mxu0 %v518
      %740 = vmatprep.subr.mxu0 %v515
      %741 = vmatpush1.msra.mxu0 %v514
      %742 = vmatprep.subr.mxu0 %v511
      %743 = vmatpush1.msra.mxu0 %v510
      %744 = vmatprep.subr.mxu0 %v507
      %745 = vmatpush1.msra.mxu0 %v506
      %746 = vmatprep.subr.mxu0 %v503
      %747 = vmatpush1.msra.mxu0 %v502
      %748 = vmatprep.subr.mxu0 %v499
      %749 = vmatpush1.msra.mxu0 %v498
      %750 = vmatprep.subr.mxu0 %v495
      %751 = vmatpush1.msra.mxu0 %v494
      %752 = vmatprep.subr.mxu0 %v491
      %753 = vmatpush1.msra.mxu0 %v490
      %754 = vmatprep.subr.mxu0 %v487
      %755 = vmatpush1.msra.mxu0 %v486
      %756 = vmatprep.subr.mxu0 %v483
      %757 = vmatpush1.msra.mxu0 %v482
      %758 = vmatprep.subr.mxu0 0.0
      %759 = vmatpush2.msra.mxu0 0.0
      %760 = vmatprep.subr.mxu0 0.0
      %761 = vmatpush2.msra.mxu0 0.0
      %762 = vmatprep.subr.mxu0 0.0
      %763 = vmatpush2.msra.mxu0 0.0
      %764 = vmatprep.subr.mxu0 0.0
      %765 = vmatpush2.msra.mxu0 0.0
      %766 = vmatprep.subr.mxu0 0.0
      %767 = vmatpush2.msra.mxu0 0.0
      %768 = vmatprep.subr.mxu0 0.0
      %769 = vmatpush2.msra.mxu0 0.0
      %770 = vmatprep.subr.mxu0 0.0
      %771 = vmatpush2.msra.mxu0 0.0
      %772 = vmatprep.subr.mxu0 0.0
      %773 = vmatpush2.msra.mxu0 0.0
      %774 = vmatprep.subr.mxu0 0.0
      %775 = vmatpush2.msra.mxu0 0.0
      %776 = vmatprep.subr.mxu0 0.0
      %777 = vmatpush2.msra.mxu0 0.0
      %778 = vmatprep.subr.mxu0 0.0
      %779 = vmatpush2.msra.mxu0 0.0
      %780 = vmatprep.subr.mxu0 0.0
      %781 = vmatpush2.msra.mxu0 0.0
      %782 = vmatprep.subr.mxu0 0.0
      %783 = vmatpush2.msra.mxu0 0.0
      %784 = vmatprep.subr.mxu0 0.0
      %785 = vmatpush2.msra.mxu0 0.0
      %786 = vmatprep.subr.mxu0 0.0
      %787 = vmatpush2.msra.mxu0 0.0
      %788 = vmatprep.subr.mxu0 0.0
      %789 = vmatpush2.msra.mxu0 0.0
      %790 = vmatprep.mubr.f32.mxu0 0.0
      %791 = vmatmul.mubr.f32.gmra.mxu0 %v721
      %v792 = vpop.f32.mrf.mxu0
      %v793 = vadd.f32 0.0, %v792
      %v794 = vpop.f32.mrf.mxu0
      %v795 = vadd.f32 0.0, %v794
      %796 = vdwg.mxu0
      %797 = vmatprep.subr.mxu0 %v545
      %798 = vmatpush1.msra.mxu0 %v544
      %799 = vmatprep.subr.mxu0 %v541
      %800 = vmatpush1.msra.mxu0 %v540
      %801 = vmatprep.subr.mxu0 %v537
      %802 = vmatpush1.msra.mxu0 %v536
      %803 = vmatprep.subr.mxu0 %v533
      %804 = vmatpush1.msra.mxu0 %v532
      %805 = vmatprep.subr.mxu0 %v529
      %806 = vmatpush1.msra.mxu0 %v528
      %807 = vmatprep.subr.mxu0 %v525
      %808 = vmatpush1.msra.mxu0 %v524
      %809 = vmatprep.subr.mxu0 %v521
      %810 = vmatpush1.msra.mxu0 %v520
      %811 = vmatprep.subr.mxu0 %v517
      %812 = vmatpush1.msra.mxu0 %v516
      %813 = vmatprep.subr.mxu0 %v513
      %814 = vmatpush1.msra.mxu0 %v512
      %815 = vmatprep.subr.mxu0 %v509
      %816 = vmatpush1.msra.mxu0 %v508
      %817 = vmatprep.subr.mxu0 %v505
      %818 = vmatpush1.msra.mxu0 %v504
      %819 = vmatprep.subr.mxu0 %v501
      %820 = vmatpush1.msra.mxu0 %v500
      %821 = vmatprep.subr.mxu0 %v497
      %822 = vmatpush1.msra.mxu0 %v496
      %823 = vmatprep.subr.mxu0 %v493
      %824 = vmatpush1.msra.mxu0 %v492
      %825 = vmatprep.subr.mxu0 %v489
      %826 = vmatpush1.msra.mxu0 %v488
      %827 = vmatprep.subr.mxu0 %v485
      %828 = vmatpush1.msra.mxu0 %v484
      %829 = vmatprep.subr.mxu0 0.0
      %830 = vmatpush2.msra.mxu0 0.0
      %831 = vmatprep.subr.mxu0 0.0
      %832 = vmatpush2.msra.mxu0 0.0
      %833 = vmatprep.subr.mxu0 0.0
      %834 = vmatpush2.msra.mxu0 0.0
      %835 = vmatprep.subr.mxu0 0.0
      %836 = vmatpush2.msra.mxu0 0.0
      %837 = vmatprep.subr.mxu0 0.0
      %838 = vmatpush2.msra.mxu0 0.0
      %839 = vmatprep.subr.mxu0 0.0
      %840 = vmatpush2.msra.mxu0 0.0
      %841 = vmatprep.subr.mxu0 0.0
      %842 = vmatpush2.msra.mxu0 0.0
      %843 = vmatprep.subr.mxu0 0.0
      %844 = vmatpush2.msra.mxu0 0.0
      %845 = vmatprep.subr.mxu0 0.0
      %846 = vmatpush2.msra.mxu0 0.0
      %847 = vmatprep.subr.mxu0 0.0
      %848 = vmatpush2.msra.mxu0 0.0
      %849 = vmatprep.subr.mxu0 0.0
      %850 = vmatpush2.msra.mxu0 0.0
      %851 = vmatprep.subr.mxu0 0.0
      %852 = vmatpush2.msra.mxu0 0.0
      %853 = vmatprep.subr.mxu0 0.0
      %854 = vmatpush2.msra.mxu0 0.0
      %855 = vmatprep.subr.mxu0 0.0
      %856 = vmatpush2.msra.mxu0 0.0
      %857 = vmatprep.subr.mxu0 0.0
      %858 = vmatpush2.msra.mxu0 0.0
      %859 = vmatprep.subr.mxu0 0.0
      %860 = vmatpush2.msra.mxu0 0.0
      %861 = vmatprep.mubr.f32.mxu0 0.0
      %862 = vmatmul.mubr.f32.gmra.mxu0 %v721
      %v863 = vpop.f32.mrf.mxu0
      %v864 = vadd.f32 0.0, %v863
      %v865 = vpop.f32.mrf.mxu0
      %v866 = vadd.f32 0.0, %v865
      %867 = vdwg.mxu0
      %v868 = vadd.f32 %v722, %v793
      %v869 = vadd.f32 %v723, %v795
      %v870 = vadd.f32 %v724, %v864
      %v871 = vadd.f32 %v725, %v866
      %v872 = vxor.u32 %v868, 2147483648
      %v873 = vxor.u32 %v869, 2147483648
      %v874 = vxor.u32 %v870, 2147483648
      %v875 = vmul.f32 %v872, 1.442695
      %v876 = vpow.pop %v875
      %v877 = vmul.f32 %v873, 1.442695
      %v878 = vpow.pop %v877
      %v879 = vmul.f32 %v874, 1.442695
      %v880 = vpow.pop %v879
      %v881 = vadd.f32 %v876, 1.0
      %v882 = vadd.f32 %v878, 1.0
      %v883 = vadd.f32 %v880, 1.0
      %v884 = vrcp.pop %v881
      %v885 = vmul.f32 1.0, %v884
      %v886 = vrcp.pop %v882
      %v887 = vmul.f32 1.0, %v886
      %v888 = vrcp.pop %v883
      %v889 = vmul.f32 1.0, %v888
      %v890 = vtanh.pop %v871
      %v891 = vmul.f32 %v887, %v719
      %v892 = vmul.f32 %v885, %v890
      %v893 = vadd.f32 %v891, %v892
      %v894 = vtanh.pop %v893
      %v895 = vmul.f32 %v889, %v894
      %896 = vst [vmem:[#allocation2] sm:$0xff] %v895
      %897 = vst [vmem:[#allocation3] sm:$0xff] %v893
      %p898 = scmp.eq.s32.totalorder %s22, 1
      // Predicated region
      $region49: #{lstm_classifier_forward.1} parent=43 // pred_check
        %p899 = pneg %p898
      $region50: #{lstm_classifier_forward.1} parent=43 // pred_check_branch
        %901 = sbr.rel (%p899) target = $region52
      $region51: #{lstm_classifier_forward.1} parent=43 // pred_region
        %v902 = vld [vmem:[#allocation2] sm:$0xff]
        %v903 = vld [vmem:[%s4] sm:$0xff]
        %v904 = vld [vmem:[%s4 + $0x8] sm:$0xff]
        %v905 = vld [vmem:[%s4 + $0x10] sm:$0xff]
        %v906 = vld [vmem:[%s4 + $0x18] sm:$0xff]
        %v907 = vld [vmem:[%s4 + $0x20] sm:$0xff]
        %v908 = vld [vmem:[%s4 + $0x28] sm:$0xff]
        %v909 = vld [vmem:[%s4 + $0x30] sm:$0xff]
        %v910 = vld [vmem:[%s4 + $0x38] sm:$0xff]
        %v911 = vld [vmem:[%s4 + $0x40] sm:$0xff]
        %v912 = vld [vmem:[%s4 + $0x48] sm:$0xff]
        %v913 = vld [vmem:[%s4 + $0x50] sm:$0xff]
        %v914 = vld [vmem:[%s4 + $0x58] sm:$0xff]
        %v915 = vld [vmem:[%s4 + $0x60] sm:$0xff]
        %v916 = vld [vmem:[%s4 + $0x68] sm:$0xff]
        %v917 = vld [vmem:[%s4 + $0x70] sm:$0xff]
        %v918 = vld [vmem:[%s4 + $0x78] sm:$0xff]
        %v919 = vld [vmem:[%s5] sm:$0x1]
        %v921 = vlaneseq
        %v922 = vshrl.u32 %v921, 7
        %v923 = vsub.s32 0, %v922
        %v924 = vrot.slane %v919, %v923
        %926 = vmatprep.subr.mxu0 0.0
        %927 = vmatpush1.msra.mxu0 %v918
        %928 = vmatprep.subr.mxu0 0.0
        %929 = vmatpush1.msra.mxu0 %v917
        %930 = vmatprep.subr.mxu0 0.0
        %931 = vmatpush1.msra.mxu0 %v916
        %932 = vmatprep.subr.mxu0 0.0
        %933 = vmatpush1.msra.mxu0 %v915
        %934 = vmatprep.subr.mxu0 0.0
        %935 = vmatpush1.msra.mxu0 %v914
        %936 = vmatprep.subr.mxu0 0.0
        %937 = vmatpush1.msra.mxu0 %v913
        %938 = vmatprep.subr.mxu0 0.0
        %939 = vmatpush1.msra.mxu0 %v912
        %940 = vmatprep.subr.mxu0 0.0
        %941 = vmatpush1.msra.mxu0 %v911
        %942 = vmatprep.subr.mxu0 0.0
        %943 = vmatpush1.msra.mxu0 %v910
        %944 = vmatprep.subr.mxu0 0.0
        %945 = vmatpush1.msra.mxu0 %v909
        %946 = vmatprep.subr.mxu0 0.0
        %947 = vmatpush1.msra.mxu0 %v908
        %948 = vmatprep.subr.mxu0 0.0
        %949 = vmatpush1.msra.mxu0 %v907
        %950 = vmatprep.subr.mxu0 0.0
        %951 = vmatpush1.msra.mxu0 %v906
        %952 = vmatprep.subr.mxu0 0.0
        %953 = vmatpush1.msra.mxu0 %v905
        %954 = vmatprep.subr.mxu0 0.0
        %955 = vmatpush1.msra.mxu0 %v904
        %956 = vmatprep.subr.mxu0 0.0
        %957 = vmatpush1.msra.mxu0 %v903
        %958 = vmatprep.subr.mxu0 0.0
        %959 = vmatpush2.msra.mxu0 0.0
        %960 = vmatprep.subr.mxu0 0.0
        %961 = vmatpush2.msra.mxu0 0.0
        %962 = vmatprep.subr.mxu0 0.0
        %963 = vmatpush2.msra.mxu0 0.0
        %964 = vmatprep.subr.mxu0 0.0
        %965 = vmatpush2.msra.mxu0 0.0
        %966 = vmatprep.subr.mxu0 0.0
        %967 = vmatpush2.msra.mxu0 0.0
        %968 = vmatprep.subr.mxu0 0.0
        %969 = vmatpush2.msra.mxu0 0.0
        %970 = vmatprep.subr.mxu0 0.0
        %971 = vmatpush2.msra.mxu0 0.0
        %972 = vmatprep.subr.mxu0 0.0
        %973 = vmatpush2.msra.mxu0 0.0
        %974 = vmatprep.subr.mxu0 0.0
        %975 = vmatpush2.msra.mxu0 0.0
        %976 = vmatprep.subr.mxu0 0.0
        %977 = vmatpush2.msra.mxu0 0.0
        %978 = vmatprep.subr.mxu0 0.0
        %979 = vmatpush2.msra.mxu0 0.0
        %980 = vmatprep.subr.mxu0 0.0
        %981 = vmatpush2.msra.mxu0 0.0
        %982 = vmatprep.subr.mxu0 0.0
        %983 = vmatpush2.msra.mxu0 0.0
        %984 = vmatprep.subr.mxu0 0.0
        %985 = vmatpush2.msra.mxu0 0.0
        %986 = vmatprep.subr.mxu0 0.0
        %987 = vmatpush2.msra.mxu0 0.0
        %988 = vmatprep.subr.mxu0 0.0
        %989 = vmatpush2.msra.mxu0 0.0
        %990 = vmatprep.mubr.f32.mxu0 0.0
        %991 = vmatmul.mubr.f32.gmra.mxu0 %v902
        %v992 = vpop.f32.mrf.mxu0
        %v993 = vadd.f32 %v924, %v992
        %v994 = vpop.f32.mrf.mxu0
        %995 = vdwg.mxu0
        %996 = vmax.xlane.f32.xlu0 %v993
        %v997 = vpop.xlane.xlu0 %996
        %v998 = vsub.f32 %v993, %v997
        %v999 = vmul.f32 %v998, 1.442695
        %v1000 = vpow.pop %v999
        %1001 = vadd.xlane.f32.xlu0 %v1000
        %v1002 = vpop.xlane.xlu0 %1001
        %v1003 = vrcp.pop %v1002
        %v1004 = vmul.f32 %v1000, %v1003
        %1005 = vst [vmem:[%s274] sm:$0xff] %v1004
      $region52: #{lstm_classifier_forward.1} parent=43 // pred_fallthru
        _
      %p1006 = scmp.lt.s32.totalorder %s21, 0
      %s1007 = scalar_select %p1006, %s21, 0
      %s1008 = smul.addr %s1007, 8
      %s1009 = scalar_lea.vmem %s6, %s1008
      // Predicated region
      $region53: #{lstm_classifier_forward.1} parent=43 // pred_check
        %p1010 = pneg %p180
      $region54: #{lstm_classifier_forward.1} parent=43 // pred_check_branch
        %1012 = sbr.rel (%p1010) target = $region56
      $region55: #{lstm_classifier_forward.1} parent=43 // pred_region
        _
      $region56: #{lstm_classifier_forward.1} parent=43 // pred_fallthru
        _
      // Predicated region
      $region57: #{lstm_classifier_forward.1} parent=43 // pred_check
        %p1013 = pneg %p180
      $region58: #{lstm_classifier_forward.1} parent=43 // pred_check_branch
        %1015 = sbr.rel (%p1013) target = $region60
      $region59: #{lstm_classifier_forward.1} parent=43 // pred_region
        %p1016 = scmp.lt.s32.totalorder %s21, 0
        %s1017 = scalar_select %p1016, %s21, 0
        %s1018 = smul.addr %s1017, 8
        %s1019 = scalar_lea.vmem %s6, %s1018
      $region60: #{lstm_classifier_forward.1} parent=43 // pred_fallthru
        _
    $region44: #{lstm_classifier_forward.1} parent=5 // pred_fallthru
      _
    %p1020 = scmp.le.s32.totalorder 2, %s12
    // Predicated region
    $region61: #{lstm_classifier_forward.1} parent=5 // pred_check
      %p1021 = pneg %p1020
    $region62: #{lstm_classifier_forward.1} parent=5 // pred_check_branch
      %1023 = sbr.rel (%p1021) target = $region64
    $region63: #{lstm_classifier_forward.1} parent=5 // pred_region
      %s1024 = ssub.s32 %s12, 2
    $region64: #{lstm_classifier_forward.1} parent=5 // pred_fallthru
      _
  $region6: #{lstm_classifier_forward.1} parent=0 // loop_footer
    %s16 = sadd.s32 1, %s12
  $region7: #{lstm_classifier_forward.1} parent=0 // loop_footer_branch
    %11 = sbr.rel target = $region3
  $region8: #{lstm_classifier_forward.1} parent=0 // loop_exit
    _

</llo_original>
